<compile_context>
chip_gen: v7x
topology: tpu7x:2x2x1
jax: 0.10.0
libtpu: 0.0.40
codegen_flags: <defaults>
</compile_context>

<pallas_src>
import math

import jax
import jax.numpy as jnp
from jax.experimental import pallas as pl
from jax.experimental.pallas import tpu as pltpu


HID = 64            # hidden width in the PyTorch module
HID_PAD = 128       # lane-dense padded hidden width (zero-padded, exact)
MAX_BATCH_TILE = 256


# ----------------------------------------------------------------------------
# Kernel: one batch tile through the whole 3-layer MLP.
# ----------------------------------------------------------------------------
def _eta_kernel(
    s_ref, a_ref,                 # (TB, state_dim) bf16, (TB, action_dim) bf16
    w1s_ref, w1a_ref, b1_ref,     # (state_dim, 128) bf16, (action_dim, 128) bf16, (1, 128) f32
    w2_ref, b2_ref,               # (128, 128) bf16, (1, 128) f32
    w3_ref, b3_ref,               # (128, 1) bf16, (1, 1) f32
    out_ref,                      # (TB, 1) f32
):
    # Layer 1 (concat-free): s @ W1_s + a @ W1_a + b1, accumulate in f32.
    h = (
        jnp.dot(s_ref[...], w1s_ref[...], preferred_element_type=jnp.float32)
        + jnp.dot(a_ref[...], w1a_ref[...], preferred_element_type=jnp.float32)
        + b1_ref[...]
    )
    h = jnp.maximum(h, 0.0)

    # Layer 2.
    h = (
        jnp.dot(h.astype(w2_ref.dtype), w2_ref[...],
                preferred_element_type=jnp.float32)
        + b2_ref[...]
    )
    h = jnp.maximum(h, 0.0)

    # Output head.
    eta = (
        jnp.dot(h.astype(w3_ref.dtype), w3_ref[...],
                preferred_element_type=jnp.float32)
        + b3_ref[...]
    )
    out_ref[...] = eta.astype(out_ref.dtype)


@jax.jit
def eta_forward(state, action, params):
    """Pallas-backed equivalent of ETA.forward(s, a) -> (B,)."""
    B, state_dim = state.shape
    _, action_dim = action.shape

    # Ship matmul operands as bf16 (MXU-native on v5e/v6e/v7x, halves HBM bytes).
    s = state.astype(jnp.bfloat16)
    a = action.astype(jnp.bfloat16)

    w1s, w1a, b1 = params["w1s"], params["w1a"], params["b1"]
    w2, b2 = params["w2"], params["b2"]
    w3, b3 = params["w3"], params["b3"]

    # Batch tile: full batch if small, otherwise 256-row tiles (multiple of 8;
    # Pallas masks the partial last block).
    tb = B if B <= MAX_BATCH_TILE else MAX_BATCH_TILE
    grid = (pl.cdiv(B, tb),)

    batch_map = lambda i: (i, 0)
    full_map = lambda i: (0, 0)

    out = pl.pallas_call(
        _eta_kernel,
        out_shape=jax.ShapeDtypeStruct((B, 1), jnp.float32),
        grid=grid,
        in_specs=[
            pl.BlockSpec((tb, state_dim), batch_map),
            pl.BlockSpec((tb, action_dim), batch_map),
            pl.BlockSpec(w1s.shape, full_map),
            pl.BlockSpec(w1a.shape, full_map),
            pl.BlockSpec(b1.shape, full_map),
            pl.BlockSpec(w2.shape, full_map),
            pl.BlockSpec(b2.shape, full_map),
            pl.BlockSpec(w3.shape, full_map),
            pl.BlockSpec(b3.shape, full_map),
        ],
        out_specs=pl.BlockSpec((tb, 1), batch_map),
        compiler_params=pltpu.CompilerParams(
            dimension_semantics=("parallel",),  # megacore / v7x 2-TC sharding
        ),
    )(s, a, w1s, w1a, b1, w2, b2, w3, b3)

    return out[:, 0]  # == eta.squeeze(dim=1)


# ----------------------------------------------------------------------------
# Deterministic parameter construction (PyTorch nn.Linear default init:
# U(-1/sqrt(fan_in), 1/sqrt(fan_in))).  Weights are built in (in, out) layout,
# zero-padded 64 -> 128 on the hidden dim, split at the state/action boundary,
# and cast to bf16; biases stay f32.
# ----------------------------------------------------------------------------
def init_eta_params(key, state_dim, action_dim):
    d_in = state_dim + action_dim
    dims = [(d_in, HID), (HID, HID), (HID, 1)]
    keys = jax.random.split(key, 2 * len(dims))
    raw = []
    for i, (fan_in, fan_out) in enumerate(dims):
        bound = 1.0 / math.sqrt(fan_in)
        w = jax.random.uniform(keys[2 * i], (fan_in, fan_out), jnp.float32,
                               -bound, bound)
        b = jax.random.uniform(keys[2 * i + 1], (1, fan_out), jnp.float32,
                               -bound, bound)
        raw.append((w, b))
    (w1, b1), (w2, b2), (w3, b3) = raw

    pad = HID_PAD - HID
    w1p = jnp.pad(w1, ((0, 0), (0, pad)))
    b1p = jnp.pad(b1, ((0, 0), (0, pad)))
    w2p = jnp.pad(w2, ((0, pad), (0, pad)))
    b2p = jnp.pad(b2, ((0, 0), (0, pad)))
    w3p = jnp.pad(w3, ((0, pad), (0, 0)))

    return dict(
        w1s=w1p[:state_dim].astype(jnp.bfloat16),
        w1a=w1p[state_dim:].astype(jnp.bfloat16),
        b1=b1p,
        w2=w2p.astype(jnp.bfloat16),
        b2=b2p,
        w3=w3p.astype(jnp.bfloat16),
        b3=b3,
    )


def _reference_forward(state, action, params):
    """Plain-JAX reference mirroring ETA.forward, fed the same bf16 weights."""
    x = jnp.concatenate(
        [state.astype(jnp.bfloat16), action.astype(jnp.bfloat16)], axis=1
    ).astype(jnp.float32)
    w1 = jnp.concatenate([params["w1s"], params["w1a"]], axis=0).astype(jnp.float32)
    h = jax.nn.relu(x @ w1 + params["b1"])
    h = jax.nn.relu(
        h.astype(jnp.bfloat16).astype(jnp.float32) @ params["w2"].astype(jnp.float32)
        + params["b2"]
    )
    eta = (
        h.astype(jnp.bfloat16).astype(jnp.float32) @ params["w3"].astype(jnp.float32)
        + params["b3"]
    )
    return eta[:, 0]


# TODO(synk): ETA.save / ETA.load (torch.save / torch.load) have no Pallas
# equivalent and are intentionally omitted.

if __name__ == "__main__":
    key = jax.random.PRNGKey(0)
    k_param, k_state, k_action = jax.random.split(key, 3)

    state_dim, action_dim, batch = 16, 8, 2
    params = init_eta_params(k_param, state_dim, action_dim)

    state = jax.random.normal(k_state, (batch, state_dim), jnp.float32)
    action = jax.random.normal(k_action, (batch, action_dim), jnp.float32)

    eta = eta_forward(state, action, params)
    jax.block_until_ready(eta)

    ref = _reference_forward(state, action, params)
    assert eta.shape == (batch,)
    assert jnp.allclose(eta, ref, atol=1e-3, rtol=1e-3)

    print("KERNEL_OK")
</pallas_src>

<mosaic_0001>
module attributes {stable_mosaic.version = 11 : i64} {
  func.func @_eta_kernel(%arg0: i32, %arg1: memref<2x16xbf16, #tpu.memory_space<vmem>>, %arg2: memref<2x8xbf16, #tpu.memory_space<vmem>>, %arg3: memref<16x128xbf16, #tpu.memory_space<vmem>>, %arg4: memref<8x128xbf16, #tpu.memory_space<vmem>>, %arg5: memref<1x128xf32, #tpu.memory_space<vmem>>, %arg6: memref<128x128xbf16, #tpu.memory_space<vmem>>, %arg7: memref<1x128xf32, #tpu.memory_space<vmem>>, %arg8: memref<128x1xbf16, #tpu.memory_space<vmem>>, %arg9: memref<1x1xf32, #tpu.memory_space<vmem>>, %arg10: memref<2x1xf32, #tpu.memory_space<vmem>>) attributes {dimension_semantics = [#tpu.dimension_semantics<parallel>], iteration_bounds = array<i64: 1>, scalar_prefetch = 0 : i64, scratch_operands = 0 : i64, tpu.core_type = #tpu.core_type<tc>, window_params = [{transform_indices = @transform_0, window_bounds = array<i64: 2, 16>}, {transform_indices = @transform_1, window_bounds = array<i64: 2, 8>}, {pipeline_mode = #tpu.pipeline_mode<synchronous>, transform_indices = @transform_2, window_bounds = array<i64: 16, 128>}, {pipeline_mode = #tpu.pipeline_mode<synchronous>, transform_indices = @transform_3, window_bounds = array<i64: 8, 128>}, {pipeline_mode = #tpu.pipeline_mode<synchronous>, transform_indices = @transform_4, window_bounds = array<i64: 1, 128>}, {pipeline_mode = #tpu.pipeline_mode<synchronous>, transform_indices = @transform_5, window_bounds = array<i64: 128, 128>}, {pipeline_mode = #tpu.pipeline_mode<synchronous>, transform_indices = @transform_6, window_bounds = array<i64: 1, 128>}, {pipeline_mode = #tpu.pipeline_mode<synchronous>, transform_indices = @transform_7, window_bounds = array<i64: 128, 1>}, {pipeline_mode = #tpu.pipeline_mode<synchronous>, transform_indices = @transform_8, window_bounds = array<i64: 1, 1>}, {transform_indices = @transform_9, window_bounds = array<i64: 2, 1>}]} {
    %c0 = arith.constant 0 : index
    %c0_0 = arith.constant 0 : index
    %0 = vector.load %arg1[%c0, %c0_0] : memref<2x16xbf16, #tpu.memory_space<vmem>>, vector<2x16xbf16>
    %c0_1 = arith.constant 0 : index
    %c0_2 = arith.constant 0 : index
    %1 = vector.load %arg3[%c0_1, %c0_2] : memref<16x128xbf16, #tpu.memory_space<vmem>>, vector<16x128xbf16>
    %cst = arith.constant dense<0.000000e+00> : vector<2x128xf32>
    %2 = tpu.matmul %0, %1, %cst {dimension_numbers = #tpu.dot_dimension_numbers<[1], [0], [0], [1], [0, 0, 1, 1], [], []>} : vector<2x16xbf16>, vector<16x128xbf16>, vector<2x128xf32> -> vector<2x128xf32>
    %c0_3 = arith.constant 0 : index
    %c0_4 = arith.constant 0 : index
    %3 = vector.load %arg2[%c0_3, %c0_4] : memref<2x8xbf16, #tpu.memory_space<vmem>>, vector<2x8xbf16>
    %c0_5 = arith.constant 0 : index
    %c0_6 = arith.constant 0 : index
    %4 = vector.load %arg4[%c0_5, %c0_6] : memref<8x128xbf16, #tpu.memory_space<vmem>>, vector<8x128xbf16>
    %cst_7 = arith.constant dense<0.000000e+00> : vector<2x128xf32>
    %5 = tpu.matmul %3, %4, %cst_7 {dimension_numbers = #tpu.dot_dimension_numbers<[1], [0], [0], [1], [0, 0, 1, 1], [], []>} : vector<2x8xbf16>, vector<8x128xbf16>, vector<2x128xf32> -> vector<2x128xf32>
    %6 = arith.addf %2, %5 : vector<2x128xf32>
    %c0_8 = arith.constant 0 : index
    %c0_9 = arith.constant 0 : index
    %7 = vector.load %arg5[%c0_8, %c0_9] : memref<1x128xf32, #tpu.memory_space<vmem>>, vector<1x128xf32>
    %8 = vector.broadcast %7 : vector<1x128xf32> to vector<2x128xf32>
    %9 = arith.addf %6, %8 : vector<2x128xf32>
    %cst_10 = arith.constant 0.000000e+00 : f32
    %10 = vector.broadcast %cst_10 : f32 to vector<2x128xf32>
    %11 = arith.maximumf %9, %10 : vector<2x128xf32>
    %12 = arith.truncf %11 : vector<2x128xf32> to vector<2x128xbf16>
    %c0_11 = arith.constant 0 : index
    %c0_12 = arith.constant 0 : index
    %13 = vector.load %arg6[%c0_11, %c0_12] : memref<128x128xbf16, #tpu.memory_space<vmem>>, vector<128x128xbf16>
    %cst_13 = arith.constant dense<0.000000e+00> : vector<2x128xf32>
    %14 = tpu.matmul %12, %13, %cst_13 {dimension_numbers = #tpu.dot_dimension_numbers<[1], [0], [0], [1], [0, 0, 1, 1], [], []>} : vector<2x128xbf16>, vector<128x128xbf16>, vector<2x128xf32> -> vector<2x128xf32>
    %c0_14 = arith.constant 0 : index
    %c0_15 = arith.constant 0 : index
    %15 = vector.load %arg7[%c0_14, %c0_15] : memref<1x128xf32, #tpu.memory_space<vmem>>, vector<1x128xf32>
    %16 = vector.broadcast %15 : vector<1x128xf32> to vector<2x128xf32>
    %17 = arith.addf %14, %16 : vector<2x128xf32>
    %cst_16 = arith.constant 0.000000e+00 : f32
    %18 = vector.broadcast %cst_16 : f32 to vector<2x128xf32>
    %19 = arith.maximumf %17, %18 : vector<2x128xf32>
    %20 = arith.truncf %19 : vector<2x128xf32> to vector<2x128xbf16>
    %c0_17 = arith.constant 0 : index
    %c0_18 = arith.constant 0 : index
    %21 = vector.load %arg8[%c0_17, %c0_18] : memref<128x1xbf16, #tpu.memory_space<vmem>>, vector<128x1xbf16>
    %cst_19 = arith.constant dense<0.000000e+00> : vector<2x1xf32>
    %22 = tpu.matmul %20, %21, %cst_19 {dimension_numbers = #tpu.dot_dimension_numbers<[1], [0], [0], [1], [0, 0, 1, 1], [], []>} : vector<2x128xbf16>, vector<128x1xbf16>, vector<2x1xf32> -> vector<2x1xf32>
    %c0_20 = arith.constant 0 : index
    %c0_21 = arith.constant 0 : index
    %23 = vector.load %arg9[%c0_20, %c0_21] : memref<1x1xf32, #tpu.memory_space<vmem>>, vector<1x1xf32>
    %24 = vector.broadcast %23 : vector<1x1xf32> to vector<2x1xf32>
    %25 = arith.addf %22, %24 : vector<2x1xf32>
    %c0_22 = arith.constant 0 : index
    %c0_23 = arith.constant 0 : index
    %26 = vector.load %arg10[%c0_22, %c0_23] : memref<2x1xf32, #tpu.memory_space<vmem>>, vector<2x1xf32>
    tpu.vector_store %arg10[%c0_22, %c0_23], %25 {strides = array<i32>} : memref<2x1xf32, #tpu.memory_space<vmem>>, vector<2x1xf32>,
    return
  }
  func.func @transform_0(%arg0: i32) -> (i32, i32) {
    %c0_i32 = arith.constant 0 : i32
    %c0_i32_0 = arith.constant 0 : i32
    return %arg0, %c0_i32 : i32, i32
  }
  func.func @transform_1(%arg0: i32) -> (i32, i32) {
    %c0_i32 = arith.constant 0 : i32
    %c0_i32_0 = arith.constant 0 : i32
    return %arg0, %c0_i32 : i32, i32
  }
  func.func @transform_2(%arg0: i32) -> (i32, i32) {
    %c0_i32 = arith.constant 0 : i32
    %c0_i32_0 = arith.constant 0 : i32
    %c0_i32_1 = arith.constant 0 : i32
    return %c0_i32, %c0_i32_0 : i32, i32
  }
  func.func @transform_3(%arg0: i32) -> (i32, i32) {
    %c0_i32 = arith.constant 0 : i32
    %c0_i32_0 = arith.constant 0 : i32
    %c0_i32_1 = arith.constant 0 : i32
    return %c0_i32, %c0_i32_0 : i32, i32
  }
  func.func @transform_4(%arg0: i32) -> (i32, i32) {
    %c0_i32 = arith.constant 0 : i32
    %c0_i32_0 = arith.constant 0 : i32
    %c0_i32_1 = arith.constant 0 : i32
    return %c0_i32, %c0_i32_0 : i32, i32
  }
  func.func @transform_5(%arg0: i32) -> (i32, i32) {
    %c0_i32 = arith.constant 0 : i32
    %c0_i32_0 = arith.constant 0 : i32
    %c0_i32_1 = arith.constant 0 : i32
    return %c0_i32, %c0_i32_0 : i32, i32
  }
  func.func @transform_6(%arg0: i32) -> (i32, i32) {
    %c0_i32 = arith.constant 0 : i32
    %c0_i32_0 = arith.constant 0 : i32
    %c0_i32_1 = arith.constant 0 : i32
    return %c0_i32, %c0_i32_0 : i32, i32
  }
  func.func @transform_7(%arg0: i32) -> (i32, i32) {
    %c0_i32 = arith.constant 0 : i32
    %c0_i32_0 = arith.constant 0 : i32
    %c0_i32_1 = arith.constant 0 : i32
    return %c0_i32, %c0_i32_0 : i32, i32
  }
  func.func @transform_8(%arg0: i32) -> (i32, i32) {
    %c0_i32 = arith.constant 0 : i32
    %c0_i32_0 = arith.constant 0 : i32
    %c0_i32_1 = arith.constant 0 : i32
    return %c0_i32, %c0_i32_0 : i32, i32
  }
  func.func @transform_9(%arg0: i32) -> (i32, i32) {
    %c0_i32 = arith.constant 0 : i32
    %c0_i32_0 = arith.constant 0 : i32
    return %arg0, %c0_i32 : i32, i32
  }
}

</mosaic_0001>

<llo_original>
// kernel: eta_forward.1
$region0: #{eta_forward.1}
  #allocation0 [shape = 'u32[]', space=smem, size = 0x4, offset = 0x4, fixed_abs, tag = 'smem constant byte address 0x4 - core index']
  #allocation1 [shape = 'u32[144,128]{1,0:T(1,128)}', space=vmem, size = 0x12000, scoped, tag = 'internal scratch']
  #allocation2 [shape = 'f32[1,1]{1,0:T(1,128)S(1)}', space=vmem, size = 0x200, scoped, tag = 'scoped memory for eta_forward.1']
  %s0 = inlined_call_operand.vmem [shape: bf16[2,16], index: 0, kind: input, shape index: {}]
  %s1 = inlined_call_operand.vmem [shape: bf16[2,8], index: 1, kind: input, shape index: {}]
  %s2 = inlined_call_operand.vmem [shape: bf16[16,128], index: 2, kind: input, shape index: {}]
  %s3 = inlined_call_operand.vmem [shape: bf16[8,128], index: 3, kind: input, shape index: {}]
  %s4 = inlined_call_operand.vmem [shape: f32[1,128], index: 4, kind: input, shape index: {}]
  %s5 = inlined_call_operand.vmem [shape: bf16[128,128], index: 5, kind: input, shape index: {}]
  %s6 = inlined_call_operand.vmem [shape: f32[1,128], index: 6, kind: input, shape index: {}]
  %s7 = inlined_call_operand.vmem [shape: bf16[128,1], index: 7, kind: input, shape index: {}]
  %s8 = inlined_call_operand.<no memory space> [shape: f32[1,1], index: 8, kind: input, shape index: {}]
  %s9 = inlined_call_operand.vmem [shape: f32[2,1], index: 9, kind: output, shape index: {}]
  %s10 = sld [smem:[#allocation0]]
  $region46: #{eta_forward.1} parent=0
    _
  %s12 = ssub.s32 1, %s10
  %s13 = scalar_select 0, %s12, %s10
  %v14 = vstv %s8
  %15 = vst [vmem:[#allocation2] sm:$0x1] %v14
  // Predicated region
  $region2: #{eta_forward.1} parent=0 // pred_check
    _
  $region3: #{eta_forward.1} parent=0 // pred_check_branch
    %17 = sbr.rel (0) target = $region5
  $region4: #{eta_forward.1} parent=0 // pred_region
    _
  $region5: #{eta_forward.1} parent=0 // pred_fallthru
    _
  // Predicated region
  $region6: #{eta_forward.1} parent=0 // pred_check
    _
  $region7: #{eta_forward.1} parent=0 // pred_check_branch
    %19 = sbr.rel (0) target = $region9
  $region8: #{eta_forward.1} parent=0 // pred_region
    _
  $region9: #{eta_forward.1} parent=0 // pred_fallthru
    _
  // Predicated region
  $region10: #{eta_forward.1} parent=0 // pred_check
    _
  $region11: #{eta_forward.1} parent=0 // pred_check_branch
    %21 = sbr.rel (0) target = $region13
  $region12: #{eta_forward.1} parent=0 // pred_region
    _
  $region13: #{eta_forward.1} parent=0 // pred_fallthru
    _
  // Predicated region
  $region14: #{eta_forward.1} parent=0 // pred_check
    _
  $region15: #{eta_forward.1} parent=0 // pred_check_branch
    %23 = sbr.rel (0) target = $region17
  $region16: #{eta_forward.1} parent=0 // pred_region
    _
  $region17: #{eta_forward.1} parent=0 // pred_fallthru
    _
  // Predicated region
  $region18: #{eta_forward.1} parent=0 // pred_check
    _
  $region19: #{eta_forward.1} parent=0 // pred_check_branch
    %25 = sbr.rel (0) target = $region21
  $region20: #{eta_forward.1} parent=0 // pred_region
    _
  $region21: #{eta_forward.1} parent=0 // pred_fallthru
    _
  // Predicated region
  $region22: #{eta_forward.1} parent=0 // pred_check
    _
  $region23: #{eta_forward.1} parent=0 // pred_check_branch
    %27 = sbr.rel (0) target = $region25
  $region24: #{eta_forward.1} parent=0 // pred_region
    _
  $region25: #{eta_forward.1} parent=0 // pred_fallthru
    _
  // Predicated region
  $region26: #{eta_forward.1} parent=0 // pred_check
    _
  $region27: #{eta_forward.1} parent=0 // pred_check_branch
    %29 = sbr.rel (0) target = $region29
  $region28: #{eta_forward.1} parent=0 // pred_region
    _
  $region29: #{eta_forward.1} parent=0 // pred_fallthru
    _
  // Predicated region
  $region30: #{eta_forward.1} parent=0 // pred_check
    _
  $region31: #{eta_forward.1} parent=0 // pred_check_branch
    %31 = sbr.rel (0) target = $region33
  $region32: #{eta_forward.1} parent=0 // pred_region
    _
  $region33: #{eta_forward.1} parent=0 // pred_fallthru
    _
  // Predicated region
  $region34: #{eta_forward.1} parent=0 // pred_check
    _
  $region35: #{eta_forward.1} parent=0 // pred_check_branch
    %33 = sbr.rel (0) target = $region37
  $region36: #{eta_forward.1} parent=0 // pred_region
    _
  $region37: #{eta_forward.1} parent=0 // pred_fallthru
    _
  %v35 = vld [vmem:[%s0] sm:$0x1]
  %v36 = vld [vmem:[%s2] sm:$0xf]
  %v37 = vld [vmem:[%s2 + $0x4] sm:$0xf]
  %v38 = vld [vmem:[%s1] sm:$0x1]
  %v39 = vld [vmem:[%s3] sm:$0xf]
  %vm40 = vcmask 64512
  %v42 = vsel %vm40, %v38, 0
  %vm44 = vcmask 1043456
  %v46 = vsel %vm44, %v39, 0
  %48 = vmatprep.subr.bf16.mxu0 0
  %49 = vmatpush1.bf16.msra.mxu0 %v46
  %50 = vmatprep.subr.bf16.mxu0 0
  %51 = vmatpush1.bf16.msra.mxu0 0
  %52 = vmatprep.subr.bf16.mxu0 0
  %53 = vmatpush1.bf16.msra.mxu0 0
  %54 = vmatprep.subr.bf16.mxu0 0
  %55 = vmatpush1.bf16.msra.mxu0 0
  %56 = vmatprep.subr.bf16.mxu0 0
  %57 = vmatpush1.bf16.msra.mxu0 0
  %58 = vmatprep.subr.bf16.mxu0 0
  %59 = vmatpush1.bf16.msra.mxu0 0
  %60 = vmatprep.subr.bf16.mxu0 0
  %61 = vmatpush1.bf16.msra.mxu0 0
  %62 = vmatprep.subr.bf16.mxu0 0
  %63 = vmatpush1.bf16.msra.mxu0 0
  %64 = vmatprep.subr.bf16.mxu0 0
  %65 = vmatpush1.bf16.msra.mxu0 0
  %66 = vmatprep.subr.bf16.mxu0 0
  %67 = vmatpush1.bf16.msra.mxu0 0
  %68 = vmatprep.subr.bf16.mxu0 0
  %69 = vmatpush1.bf16.msra.mxu0 0
  %70 = vmatprep.subr.bf16.mxu0 0
  %71 = vmatpush1.bf16.msra.mxu0 0
  %72 = vmatprep.subr.bf16.mxu0 0
  %73 = vmatpush1.bf16.msra.mxu0 0
  %74 = vmatprep.subr.bf16.mxu0 0
  %75 = vmatpush1.bf16.msra.mxu0 0
  %76 = vmatprep.subr.bf16.mxu0 0
  %77 = vmatpush1.bf16.msra.mxu0 0
  %78 = vmatprep.subr.bf16.mxu0 0
  %79 = vmatpush1.bf16.msra.mxu0 0
  %80 = vmatprep.mubr.bf16.mxu0 0
  %81 = vmatmul.mubr.bf16.gmra.mrb[0].mxu0 %v42
  %v82 = vpop.f32.mrb[0].mxu0
  %v83 = vadd.f32 0.0, %v82
  %v84 = vpop.f32.mrb[0].mxu0
  %v85 = vpop.f32.mrb[0].mxu0
  %v86 = vpop.f32.mrb[0].mxu0
  %87 = vdwg.mxu0
  %v90 = vunpack.c.l.b16 %v36
  %v91 = vunpack.c.l.b16 %v37
  %v92 = vpack.c.b16 %v91, %v90
  %vm94 = vcmask 130048
  %v96 = vsel %vm94, %v35, 0
  %98 = vmatprep.subr.bf16.mxu0 0
  %99 = vmatpush1.bf16.msra.mxu0 %v92
  %100 = vmatprep.subr.bf16.mxu0 0
  %101 = vmatpush1.bf16.msra.mxu0 0
  %102 = vmatprep.subr.bf16.mxu0 0
  %103 = vmatpush1.bf16.msra.mxu0 0
  %104 = vmatprep.subr.bf16.mxu0 0
  %105 = vmatpush1.bf16.msra.mxu0 0
  %106 = vmatprep.subr.bf16.mxu0 0
  %107 = vmatpush1.bf16.msra.mxu0 0
  %108 = vmatprep.subr.bf16.mxu0 0
  %109 = vmatpush1.bf16.msra.mxu0 0
  %110 = vmatprep.subr.bf16.mxu0 0
  %111 = vmatpush1.bf16.msra.mxu0 0
  %112 = vmatprep.subr.bf16.mxu0 0
  %113 = vmatpush1.bf16.msra.mxu0 0
  %114 = vmatprep.subr.bf16.mxu0 0
  %115 = vmatpush1.bf16.msra.mxu0 0
  %116 = vmatprep.subr.bf16.mxu0 0
  %117 = vmatpush1.bf16.msra.mxu0 0
  %118 = vmatprep.subr.bf16.mxu0 0
  %119 = vmatpush1.bf16.msra.mxu0 0
  %120 = vmatprep.subr.bf16.mxu0 0
  %121 = vmatpush1.bf16.msra.mxu0 0
  %122 = vmatprep.subr.bf16.mxu0 0
  %123 = vmatpush1.bf16.msra.mxu0 0
  %124 = vmatprep.subr.bf16.mxu0 0
  %125 = vmatpush1.bf16.msra.mxu0 0
  %126 = vmatprep.subr.bf16.mxu0 0
  %127 = vmatpush1.bf16.msra.mxu0 0
  %128 = vmatprep.subr.bf16.mxu0 0
  %129 = vmatpush1.bf16.msra.mxu0 0
  %130 = vmatprep.mubr.bf16.mxu0 0
  %131 = vmatmul.mubr.bf16.gmra.mrb[0].mxu0 %v96
  %v132 = vpop.f32.mrb[0].mxu0
  %v133 = vadd.f32 %v83, %v132
  %v134 = vpop.f32.mrb[0].mxu0
  %v135 = vpop.f32.mrb[0].mxu0
  %v136 = vpop.f32.mrb[0].mxu0
  %137 = vdwg.mxu0
  %v138 = vld [vmem:[%s4] sm:$0x1]
  %v140 = vlaneseq
  %v141 = vshrl.u32 %v140, 7
  %v142 = vsub.s32 0, %v141
  %v143 = vrot.slane %v138, %v142
  %v145 = vadd.f32 %v133, %v143
  %v146 = vmax.f32 %v145, 0.0
  %v147 = vpack.c.bf16 %v146, %v146
  %v148 = vld [vmem:[%s5] sm:$0xf]
  %v149 = vld [vmem:[%s5 + $0x4] sm:$0xf]
  %v150 = vld [vmem:[%s5 + $0x8] sm:$0xf]
  %v151 = vld [vmem:[%s5 + $0xc] sm:$0xf]
  %v152 = vld [vmem:[%s5 + $0x10] sm:$0xf]
  %v153 = vld [vmem:[%s5 + $0x14] sm:$0xf]
  %v154 = vld [vmem:[%s5 + $0x18] sm:$0xf]
  %v155 = vld [vmem:[%s5 + $0x1c] sm:$0xf]
  %v156 = vld [vmem:[%s5 + $0x20] sm:$0xf]
  %v157 = vld [vmem:[%s5 + $0x24] sm:$0xf]
  %v158 = vld [vmem:[%s5 + $0x28] sm:$0xf]
  %v159 = vld [vmem:[%s5 + $0x2c] sm:$0xf]
  %v160 = vld [vmem:[%s5 + $0x30] sm:$0xf]
  %v161 = vld [vmem:[%s5 + $0x34] sm:$0xf]
  %v162 = vld [vmem:[%s5 + $0x38] sm:$0xf]
  %v163 = vld [vmem:[%s5 + $0x3c] sm:$0xf]
  %v164 = vld [vmem:[%s6] sm:$0x1]
  %v166 = vlaneseq
  %v167 = vshrl.u32 %v166, 7
  %v168 = vsub.s32 0, %v167
  %v169 = vrot.slane %v164, %v168
  %v187 = vunpack.c.l.b16 %v148
  %v188 = vunpack.c.l.b16 %v149
  %v189 = vunpack.c.l.b16 %v150
  %v190 = vunpack.c.l.b16 %v151
  %v191 = vunpack.c.l.b16 %v152
  %v192 = vunpack.c.l.b16 %v153
  %v193 = vunpack.c.l.b16 %v154
  %v194 = vunpack.c.l.b16 %v155
  %v195 = vunpack.c.l.b16 %v156
  %v196 = vunpack.c.l.b16 %v157
  %v197 = vunpack.c.l.b16 %v158
  %v198 = vunpack.c.l.b16 %v159
  %v199 = vunpack.c.l.b16 %v160
  %v200 = vunpack.c.l.b16 %v161
  %v201 = vunpack.c.l.b16 %v162
  %v202 = vunpack.c.l.b16 %v163
  %v203 = vpack.c.b16 %v188, %v187
  %v204 = vpack.c.b16 %v190, %v189
  %v205 = vpack.c.b16 %v192, %v191
  %v206 = vpack.c.b16 %v194, %v193
  %v207 = vpack.c.b16 %v196, %v195
  %v208 = vpack.c.b16 %v198, %v197
  %v209 = vpack.c.b16 %v200, %v199
  %v210 = vpack.c.b16 %v202, %v201
  %219 = vmatprep.subr.bf16.mxu0 0
  %220 = vmatpush1.bf16.msra.mxu0 %v203
  %221 = vmatprep.subr.bf16.mxu0 0
  %222 = vmatpush1.bf16.msra.mxu0 %v204
  %223 = vmatprep.subr.bf16.mxu0 0
  %224 = vmatpush1.bf16.msra.mxu0 %v205
  %225 = vmatprep.subr.bf16.mxu0 0
  %226 = vmatpush1.bf16.msra.mxu0 %v206
  %227 = vmatprep.subr.bf16.mxu0 0
  %228 = vmatpush1.bf16.msra.mxu0 %v207
  %229 = vmatprep.subr.bf16.mxu0 0
  %230 = vmatpush1.bf16.msra.mxu0 %v208
  %231 = vmatprep.subr.bf16.mxu0 0
  %232 = vmatpush1.bf16.msra.mxu0 %v209
  %233 = vmatprep.subr.bf16.mxu0 0
  %234 = vmatpush1.bf16.msra.mxu0 %v210
  %235 = vmatprep.subr.bf16.mxu0 0
  %236 = vmatpush1.bf16.msra.mxu0 0
  %237 = vmatprep.subr.bf16.mxu0 0
  %238 = vmatpush1.bf16.msra.mxu0 0
  %239 = vmatprep.subr.bf16.mxu0 0
  %240 = vmatpush1.bf16.msra.mxu0 0
  %241 = vmatprep.subr.bf16.mxu0 0
  %242 = vmatpush1.bf16.msra.mxu0 0
  %243 = vmatprep.subr.bf16.mxu0 0
  %244 = vmatpush1.bf16.msra.mxu0 0
  %245 = vmatprep.subr.bf16.mxu0 0
  %246 = vmatpush1.bf16.msra.mxu0 0
  %247 = vmatprep.subr.bf16.mxu0 0
  %248 = vmatpush1.bf16.msra.mxu0 0
  %249 = vmatprep.subr.bf16.mxu0 0
  %250 = vmatpush1.bf16.msra.mxu0 0
  %251 = vmatprep.mubr.bf16.mxu0 0
  %252 = vmatmul.mubr.bf16.gmra.mrb[0].mxu0 %v147
  %v253 = vpop.f32.mrb[0].mxu0
  %v254 = vadd.f32 %v169, %v253
  %v255 = vpop.f32.mrb[0].mxu0
  %v256 = vpop.f32.mrb[0].mxu0
  %v257 = vpop.f32.mrb[0].mxu0
  %258 = vdwg.mxu0
  %v259 = vmax.f32 %v254, 0.0
  %v260 = vpack.c.bf16 %v259, %v259
  %v261 = vld [vmem:[%s7] sm:$0xf]
  %v262 = vld [vmem:[%s7 + $0x4] sm:$0xf]
  %v263 = vld [vmem:[%s7 + $0x8] sm:$0xf]
  %v264 = vld [vmem:[%s7 + $0xc] sm:$0xf]
  %v265 = vld [vmem:[%s7 + $0x10] sm:$0xf]
  %v266 = vld [vmem:[%s7 + $0x14] sm:$0xf]
  %v267 = vld [vmem:[%s7 + $0x18] sm:$0xf]
  %v268 = vld [vmem:[%s7 + $0x1c] sm:$0xf]
  %v269 = vld [vmem:[%s7 + $0x20] sm:$0xf]
  %v270 = vld [vmem:[%s7 + $0x24] sm:$0xf]
  %v271 = vld [vmem:[%s7 + $0x28] sm:$0xf]
  %v272 = vld [vmem:[%s7 + $0x2c] sm:$0xf]
  %v273 = vld [vmem:[%s7 + $0x30] sm:$0xf]
  %v274 = vld [vmem:[%s7 + $0x34] sm:$0xf]
  %v275 = vld [vmem:[%s7 + $0x38] sm:$0xf]
  %v276 = vld [vmem:[%s7 + $0x3c] sm:$0xf]
  %v277 = vld [vmem:[#allocation2] sm:$0x1]
  %v279 = vlaneseq
  %v280 = vshrl.u32 %v279, 7
  %v281 = vsub.s32 0, %v280
  %v282 = vrot.slane %v277, %v281
  %v300 = vunpack.c.l.b16 %v261
  %v301 = vunpack.c.l.b16 %v262
  %v302 = vunpack.c.l.b16 %v263
  %v303 = vunpack.c.l.b16 %v264
  %v304 = vunpack.c.l.b16 %v265
  %v305 = vunpack.c.l.b16 %v266
  %v306 = vunpack.c.l.b16 %v267
  %v307 = vunpack.c.l.b16 %v268
  %v308 = vunpack.c.l.b16 %v269
  %v309 = vunpack.c.l.b16 %v270
  %v310 = vunpack.c.l.b16 %v271
  %v311 = vunpack.c.l.b16 %v272
  %v312 = vunpack.c.l.b16 %v273
  %v313 = vunpack.c.l.b16 %v274
  %v314 = vunpack.c.l.b16 %v275
  %v315 = vunpack.c.l.b16 %v276
  %v316 = vpack.c.b16 %v301, %v300
  %v317 = vpack.c.b16 %v303, %v302
  %v318 = vpack.c.b16 %v305, %v304
  %v319 = vpack.c.b16 %v307, %v306
  %v320 = vpack.c.b16 %v309, %v308
  %v321 = vpack.c.b16 %v311, %v310
  %v322 = vpack.c.b16 %v313, %v312
  %v323 = vpack.c.b16 %v315, %v314
  %332 = vmatprep.subr.bf16.mxu0 0
  %333 = vmatpush1.bf16.msra.mxu0 %v316
  %334 = vmatprep.subr.bf16.mxu0 0
  %335 = vmatpush1.bf16.msra.mxu0 %v317
  %336 = vmatprep.subr.bf16.mxu0 0
  %337 = vmatpush1.bf16.msra.mxu0 %v318
  %338 = vmatprep.subr.bf16.mxu0 0
  %339 = vmatpush1.bf16.msra.mxu0 %v319
  %340 = vmatprep.subr.bf16.mxu0 0
  %341 = vmatpush1.bf16.msra.mxu0 %v320
  %342 = vmatprep.subr.bf16.mxu0 0
  %343 = vmatpush1.bf16.msra.mxu0 %v321
  %344 = vmatprep.subr.bf16.mxu0 0
  %345 = vmatpush1.bf16.msra.mxu0 %v322
  %346 = vmatprep.subr.bf16.mxu0 0
  %347 = vmatpush1.bf16.msra.mxu0 %v323
  %348 = vmatprep.subr.bf16.mxu0 0
  %349 = vmatpush1.bf16.msra.mxu0 0
  %350 = vmatprep.subr.bf16.mxu0 0
  %351 = vmatpush1.bf16.msra.mxu0 0
  %352 = vmatprep.subr.bf16.mxu0 0
  %353 = vmatpush1.bf16.msra.mxu0 0
  %354 = vmatprep.subr.bf16.mxu0 0
  %355 = vmatpush1.bf16.msra.mxu0 0
  %356 = vmatprep.subr.bf16.mxu0 0
  %357 = vmatpush1.bf16.msra.mxu0 0
  %358 = vmatprep.subr.bf16.mxu0 0
  %359 = vmatpush1.bf16.msra.mxu0 0
  %360 = vmatprep.subr.bf16.mxu0 0
  %361 = vmatpush1.bf16.msra.mxu0 0
  %362 = vmatprep.subr.bf16.mxu0 0
  %363 = vmatpush1.bf16.msra.mxu0 0
  %364 = vmatprep.mubr.bf16.mxu0 0
  %365 = vmatmul.mubr.bf16.gmra.mrb[0].mxu0 %v260
  %v366 = vpop.f32.mrb[0].mxu0
  %v367 = vadd.f32 %v282, %v366
  %v368 = vpop.f32.mrb[0].mxu0
  %v369 = vpop.f32.mrb[0].mxu0
  %v370 = vpop.f32.mrb[0].mxu0
  %371 = vdwg.mxu0
  %vm372 = vcmask 1024
  %373 = vst.msk [vmem:[%s9] sm:$0x3] %vm372, %v367
  // Predicated region
  $region38: #{eta_forward.1} parent=0 // pred_check
    _
  $region39: #{eta_forward.1} parent=0 // pred_check_branch
    %375 = sbr.rel (0) target = $region41
  $region40: #{eta_forward.1} parent=0 // pred_region
    _
  $region41: #{eta_forward.1} parent=0 // pred_fallthru
    _
  // Predicated region
  $region42: #{eta_forward.1} parent=0 // pred_check
    _
  $region43: #{eta_forward.1} parent=0 // pred_check_branch
    %377 = sbr.rel (0) target = $region45
  $region44: #{eta_forward.1} parent=0 // pred_region
    _
  $region45: #{eta_forward.1} parent=0 // pred_fallthru
    _

</llo_original>
